<compile_context>
chip_gen: v6e
topology: v6e:2x2x1
jax: 0.10.0
libtpu: 0.0.40
codegen_flags: <defaults>
</compile_context>

<pallas_src>
from functools import partial

import jax
import jax.numpy as jnp
from jax.experimental import pallas as pl
from jax.experimental.pallas import tpu as pltpu

EPS = 1.1920929e-07


def _round_up(n, m):
    return ((n + m - 1) // m) * m


def ratio_kernel(x_ref, w_ref, b_ref, logits_ref, i_ref, o_ref):
    # Fused inlier+outlier linear on the MXU with a stationary (F, 2*Cpad)
    # RHS in native (K, N) layout -> no per-tile transpose work.
    y = jnp.dot(x_ref[...], w_ref[...],
                preferred_element_type=jnp.float32) + b_ref[...]

    cpad = w_ref.shape[-1] // 2      # static, multiple of 128
    c = i_ref.shape[-1]              # static num_classes (may be < 128)
    yi = y[:, :c]                    # inlier pre-activations
    yo = y[:, cpad:cpad + c]         # outlier pre-activations (lane-aligned)

    # A = 1 + exp(-y); clamp the exp argument so every intermediate stays
    # finite in f32 (clamp error ~1e-13, far below the 1e-5 tolerance).
    ai = 1.0 + jnp.exp(jnp.minimum(-yi, 30.0))
    ao = 1.0 + jnp.exp(jnp.minimum(-yo, 30.0))

    # sigmoid(i) / (sigmoid(o) + eps) == ao / (ai * (1 + eps*ao)):
    # one EUP-seeded reciprocal + two Newton refinements instead of three
    # serialized full-precision VPU divides.
    d = ai * (1.0 + EPS * ao)
    r = pl.reciprocal(d, approx=True)
    r = r * (2.0 - d * r)
    r = r * (2.0 - d * r)

    logits_ref[...] = ao * r
    i_ref[...] = yi
    o_ref[...] = yo


def prepare_ratio_params(w_in, b_in, w_out, b_out):
    """Pack PyTorch-layout (C, F) weights / (C,) biases into one stationary
    MXU-friendly fused weight (F, 2*Cpad) and bias (1, 2*Cpad), with
    Cpad = round_up(C, 128) so the outlier half starts lane-aligned.
    Call once outside the hot loop (weights are static)."""
    C, F = w_in.shape
    cpad = _round_up(C, 128)
    w_fused = jnp.zeros((F, 2 * cpad), jnp.float32)
    w_fused = w_fused.at[:, :C].set(jnp.asarray(w_in, jnp.float32).T)
    w_fused = w_fused.at[:, cpad:cpad + C].set(jnp.asarray(w_out, jnp.float32).T)
    b_fused = jnp.zeros((1, 2 * cpad), jnp.float32)
    b_fused = b_fused.at[0, :C].set(jnp.asarray(b_in, jnp.float32))
    b_fused = b_fused.at[0, cpad:cpad + C].set(jnp.asarray(b_out, jnp.float32))
    return w_fused, b_fused


@partial(jax.jit, static_argnames=("num_classes",))
def ratio_layer(x, w_fused, b_fused, *, num_classes):
    """x: (B, F) f32; (w_fused, b_fused) from prepare_ratio_params.
    Returns (logits, i, o), each (B, num_classes) -- no padding, no slicing."""
    x = jnp.asarray(x, jnp.float32)
    B, F = x.shape
    two_cpad = w_fused.shape[1]
    C = num_classes

    # --- batch tile selection --------------------------------------------
    # >=2 blocks whenever B allows (both v7x TensorCores get work); cap at
    # 512 rows and by a VMEM budget: double-buffered x tile (2*tb*F*4) plus
    # three double-buffered output tiles (6*tb*C*4) must stay well under
    # v5e's 16 MiB default scoped VMEM even for large F.
    n_split = max(2, pl.cdiv(B, 512))
    tb = _round_up(pl.cdiv(B, n_split), 8)
    vmem_budget = 10 * 1024 * 1024
    tb_cap = max(8, (vmem_budget // (8 * F + 24 * C)) // 8 * 8)
    tb = max(8, min(tb, tb_cap, 512))
    n_blocks = pl.cdiv(B, tb)        # ragged last block handled by Pallas OOB

    # --- block specs --------------------------------------------------------
    x_spec = pl.BlockSpec((tb, F), lambda b: (b, 0))
    # Constant (index_map-invariant) weight block: single-buffer it when it is
    # big enough to matter for v7x's 64 MiB VMEM; keep the default otherwise.
    w_bytes = two_cpad * F * 4
    if w_bytes > (8 << 20):
        w_spec = pl.BlockSpec((F, two_cpad), lambda b: (0, 0),
                              pipeline_mode=pl.Buffered(1))
    else:
        w_spec = pl.BlockSpec((F, two_cpad), lambda b: (0, 0))
    b_spec = pl.BlockSpec((1, two_cpad), lambda b: (0, 0))

    out_sd = jax.ShapeDtypeStruct((B, C), jnp.float32)
    out_spec = pl.BlockSpec((tb, C), lambda b: (b, 0))

    logits, i, o = pl.pallas_call(
        ratio_kernel,
        grid=(n_blocks,),
        in_specs=[x_spec, w_spec, b_spec],
        out_specs=(out_spec, out_spec, out_spec),
        out_shape=(out_sd, out_sd, out_sd),
        compiler_params=pltpu.CompilerParams(
            dimension_semantics=("parallel",)),
    )(x, w_fused, b_fused)
    return logits, i, o


def _kaiming_normal(key, out_f, in_f):
    # nn.init.kaiming_normal_(nonlinearity='relu'): std = sqrt(2 / fan_in)
    std = (2.0 / in_f) ** 0.5
    return jax.random.normal(key, (out_f, in_f), dtype=jnp.float32) * std


if __name__ == "__main__":
    B, F, C = 8, 32, 16  # batch, in_features, num_classes

    key = jax.random.PRNGKey(0)
    kx, kwi, kwo = jax.random.split(key, 3)

    x = jax.random.normal(kx, (B, F), dtype=jnp.float32)
    w_in = _kaiming_normal(kwi, C, F)
    w_out = _kaiming_normal(kwo, C, F)
    b_in = jnp.zeros((C,), jnp.float32)
    b_out = jnp.zeros((C,), jnp.float32)

    # one-time parameter packing (outside the hot path)
    w_fused, b_fused = prepare_ratio_params(w_in, b_in, w_out, b_out)

    logits, i, o = ratio_layer(x, w_fused, b_fused, num_classes=C)
    jax.block_until_ready((logits, i, o))

    # cross-check against plain-JAX reference (eval-mode forward)
    i_ref = x @ w_in.T + b_in
    o_ref = x @ w_out.T + b_out
    logits_ref = jax.nn.sigmoid(i_ref) / (jax.nn.sigmoid(o_ref) + EPS)
    assert logits.shape == (B, C) and i.shape == (B, C) and o.shape == (B, C)
    assert jnp.allclose(i, i_ref, atol=1e-5, rtol=1e-5)
    assert jnp.allclose(o, o_ref, atol=1e-5, rtol=1e-5)
    assert jnp.allclose(logits, logits_ref, atol=1e-5, rtol=1e-5)

    print("KERNEL_OK")
</pallas_src>

<mosaic_0001>
module attributes {stable_mosaic.version = 11 : i64} {
  func.func @ratio_kernel(%arg0: i32, %arg1: memref<8x32xf32, #tpu.memory_space<vmem>>, %arg2: memref<32x256xf32, #tpu.memory_space<vmem>>, %arg3: memref<1x256xf32, #tpu.memory_space<vmem>>, %arg4: memref<8x16xf32, #tpu.memory_space<vmem>>, %arg5: memref<8x16xf32, #tpu.memory_space<vmem>>, %arg6: memref<8x16xf32, #tpu.memory_space<vmem>>) attributes {dimension_semantics = [#tpu.dimension_semantics<parallel>], iteration_bounds = array<i64: 1>, scalar_prefetch = 0 : i64, scratch_operands = 0 : i64, tpu.core_type = #tpu.core_type<tc>, window_params = [{transform_indices = @transform_0, window_bounds = array<i64: 8, 32>}, {pipeline_mode = #tpu.pipeline_mode<synchronous>, transform_indices = @transform_1, window_bounds = array<i64: 32, 256>}, {pipeline_mode = #tpu.pipeline_mode<synchronous>, transform_indices = @transform_2, window_bounds = array<i64: 1, 256>}, {transform_indices = @transform_3, window_bounds = array<i64: 8, 16>}, {transform_indices = @transform_4, window_bounds = array<i64: 8, 16>}, {transform_indices = @transform_5, window_bounds = array<i64: 8, 16>}]} {
    %c0 = arith.constant 0 : index
    %c0_0 = arith.constant 0 : index
    %0 = vector.load %arg1[%c0, %c0_0] : memref<8x32xf32, #tpu.memory_space<vmem>>, vector<8x32xf32>
    %c0_1 = arith.constant 0 : index
    %c0_2 = arith.constant 0 : index
    %1 = vector.load %arg2[%c0_1, %c0_2] : memref<32x256xf32, #tpu.memory_space<vmem>>, vector<32x256xf32>
    %cst = arith.constant dense<0.000000e+00> : vector<8x256xf32>
    %2 = tpu.matmul %0, %1, %cst {dimension_numbers = #tpu.dot_dimension_numbers<[1], [0], [0], [1], [0, 0, 1, 1], [], []>} : vector<8x32xf32>, vector<32x256xf32>, vector<8x256xf32> -> vector<8x256xf32>
    %c0_3 = arith.constant 0 : index
    %c0_4 = arith.constant 0 : index
    %3 = vector.load %arg3[%c0_3, %c0_4] : memref<1x256xf32, #tpu.memory_space<vmem>>, vector<1x256xf32>
    %4 = vector.broadcast %3 : vector<1x256xf32> to vector<8x256xf32>
    %5 = arith.addf %2, %4 : vector<8x256xf32>
    %6 = vector.extract_strided_slice %5 {offsets = [0, 0], sizes = [8, 16], strides = [1, 1]} : vector<8x256xf32> to vector<8x16xf32>
    %7 = vector.extract_strided_slice %5 {offsets = [0, 128], sizes = [8, 16], strides = [1, 1]} : vector<8x256xf32> to vector<8x16xf32>
    %cst_5 = arith.constant 0.000000e+00 : f32
    %8 = vector.broadcast %cst_5 : f32 to vector<8x16xf32>
    %9 = arith.subf %8, %6 : vector<8x16xf32>
    %cst_6 = arith.constant 3.000000e+01 : f32
    %10 = vector.broadcast %cst_6 : f32 to vector<8x16xf32>
    %11 = arith.minimumf %9, %10 : vector<8x16xf32>
    %12 = math.exp %11 : vector<8x16xf32>
    %cst_7 = arith.constant 1.000000e+00 : f32
    %13 = vector.broadcast %cst_7 : f32 to vector<8x16xf32>
    %14 = arith.addf %13, %12 : vector<8x16xf32>
    %cst_8 = arith.constant 0.000000e+00 : f32
    %15 = vector.broadcast %cst_8 : f32 to vector<8x16xf32>
    %16 = arith.subf %15, %7 : vector<8x16xf32>
    %cst_9 = arith.constant 3.000000e+01 : f32
    %17 = vector.broadcast %cst_9 : f32 to vector<8x16xf32>
    %18 = arith.minimumf %16, %17 : vector<8x16xf32>
    %19 = math.exp %18 : vector<8x16xf32>
    %cst_10 = arith.constant 1.000000e+00 : f32
    %20 = vector.broadcast %cst_10 : f32 to vector<8x16xf32>
    %21 = arith.addf %20, %19 : vector<8x16xf32>
    %cst_11 = arith.constant 1.1920929E-7 : f32
    %22 = vector.broadcast %cst_11 : f32 to vector<8x16xf32>
    %23 = arith.mulf %22, %21 : vector<8x16xf32>
    %cst_12 = arith.constant 1.000000e+00 : f32
    %24 = vector.broadcast %cst_12 : f32 to vector<8x16xf32>
    %25 = arith.addf %24, %23 : vector<8x16xf32>
    %26 = arith.mulf %14, %25 : vector<8x16xf32>
    %27 = tpu.reciprocal %26 {approx = true} : vector<8x16xf32> -> vector<8x16xf32>
    %28 = arith.mulf %26, %27 : vector<8x16xf32>
    %cst_13 = arith.constant 2.000000e+00 : f32
    %29 = vector.broadcast %cst_13 : f32 to vector<8x16xf32>
    %30 = arith.subf %29, %28 : vector<8x16xf32>
    %31 = arith.mulf %27, %30 : vector<8x16xf32>
    %32 = arith.mulf %26, %31 : vector<8x16xf32>
    %cst_14 = arith.constant 2.000000e+00 : f32
    %33 = vector.broadcast %cst_14 : f32 to vector<8x16xf32>
    %34 = arith.subf %33, %32 : vector<8x16xf32>
    %35 = arith.mulf %31, %34 : vector<8x16xf32>
    %36 = arith.mulf %21, %35 : vector<8x16xf32>
    %c0_15 = arith.constant 0 : index
    %c0_16 = arith.constant 0 : index
    %37 = vector.load %arg4[%c0_15, %c0_16] : memref<8x16xf32, #tpu.memory_space<vmem>>, vector<8x16xf32>
    tpu.vector_store %arg4[%c0_15, %c0_16], %36 {strides = array<i32>} : memref<8x16xf32, #tpu.memory_space<vmem>>, vector<8x16xf32>,
    %c0_17 = arith.constant 0 : index
    %c0_18 = arith.constant 0 : index
    %38 = vector.load %arg5[%c0_17, %c0_18] : memref<8x16xf32, #tpu.memory_space<vmem>>, vector<8x16xf32>
    tpu.vector_store %arg5[%c0_17, %c0_18], %6 {strides = array<i32>} : memref<8x16xf32, #tpu.memory_space<vmem>>, vector<8x16xf32>,
    %c0_19 = arith.constant 0 : index
    %c0_20 = arith.constant 0 : index
    %39 = vector.load %arg6[%c0_19, %c0_20] : memref<8x16xf32, #tpu.memory_space<vmem>>, vector<8x16xf32>
    tpu.vector_store %arg6[%c0_19, %c0_20], %7 {strides = array<i32>} : memref<8x16xf32, #tpu.memory_space<vmem>>, vector<8x16xf32>,
    return
  }
  func.func @transform_0(%arg0: i32) -> (i32, i32) {
    %c0_i32 = arith.constant 0 : i32
    %c0_i32_0 = arith.constant 0 : i32
    return %arg0, %c0_i32 : i32, i32
  }
  func.func @transform_1(%arg0: i32) -> (i32, i32) {
    %c0_i32 = arith.constant 0 : i32
    %c0_i32_0 = arith.constant 0 : i32
    %c0_i32_1 = arith.constant 0 : i32
    return %c0_i32, %c0_i32_0 : i32, i32
  }
  func.func @transform_2(%arg0: i32) -> (i32, i32) {
    %c0_i32 = arith.constant 0 : i32
    %c0_i32_0 = arith.constant 0 : i32
    %c0_i32_1 = arith.constant 0 : i32
    return %c0_i32, %c0_i32_0 : i32, i32
  }
  func.func @transform_3(%arg0: i32) -> (i32, i32) {
    %c0_i32 = arith.constant 0 : i32
    %c0_i32_0 = arith.constant 0 : i32
    return %arg0, %c0_i32 : i32, i32
  }
  func.func @transform_4(%arg0: i32) -> (i32, i32) {
    %c0_i32 = arith.constant 0 : i32
    %c0_i32_0 = arith.constant 0 : i32
    return %arg0, %c0_i32 : i32, i32
  }
  func.func @transform_5(%arg0: i32) -> (i32, i32) {
    %c0_i32 = arith.constant 0 : i32
    %c0_i32_0 = arith.constant 0 : i32
    return %arg0, %c0_i32 : i32, i32
  }
}

</mosaic_0001>

<llo_original>
// kernel: ratio_layer.1
$region0: #{ratio_layer.1}
  #allocation0 [shape = 'u32[]', space=smem, size = 0x4, offset = 0x4, fixed_abs, tag = 'smem constant byte address 0x4 - core index']
  #allocation1 [shape = 'u32[144,128]{1,0:T(1,128)}', space=vmem, size = 0x12000, scoped, tag = 'internal scratch']
  %s0 = inlined_call_operand.hbm [shape: f32[8,32], index: 0, kind: input, shape index: {}]
  %s1 = inlined_call_operand.hbm [shape: f32[32,256], index: 1, kind: input, shape index: {}]
  %s2 = inlined_call_operand.vmem [shape: f32[1,256], index: 2, kind: input, shape index: {}]
  %s3 = inlined_call_operand.hbm [shape: f32[8,16], index: 3, kind: output, shape index: {0}]
  %s4 = inlined_call_operand.hbm [shape: f32[8,16], index: 4, kind: output, shape index: {1}]
  %s5 = inlined_call_operand.hbm [shape: f32[8,16], index: 5, kind: output, shape index: {2}]
  %6 = xla_tuple %s3, %s4, %s5
  %s7 = sld [smem:[#allocation0]]
  $region46: #{ratio_layer.1} parent=0
    _
  %s9 = ssub.s32 1, %s7
  %s10 = scalar_select 0, %s9, %s7
  $region1: #{ratio_layer.1} parent=0
    #allocation2 [shape = 'u8[4096]{0}', space=vmem, size = 0x1000, scoped, tag = 'input window, operand 0, single buffered']
    #allocation3 [shape = 's32[1]{0}', space=sflag, size = 0x4, scoped, tag = 'scoped memory for ratio_layer.1']
    #allocation4 [shape = 's32[1]{0}', space=sflag, size = 0x4, scoped, tag = 'scoped memory for ratio_layer.1']
    #allocation5 [shape = 'u8[32768]{0}', space=vmem, size = 0x8000, scoped, tag = 'input window, operand 1, single buffered']
    #allocation6 [shape = 's32[1]{0}', space=sflag, size = 0x4, scoped, tag = 'scoped memory for ratio_layer.1']
    #allocation7 [shape = 'u8[4096]{0}', space=vmem, size = 0x1000, scoped, tag = 'output window, operand 0, single buffered']
    #allocation8 [shape = 'u8[4096]{0}', space=vmem, size = 0x1000, scoped, tag = 'output window, operand 1, single buffered']
    #allocation9 [shape = 's32[1]{0}', space=sflag, size = 0x4, scoped, tag = 'scoped memory for ratio_layer.1']
    #allocation10 [shape = 'u8[4096]{0}', space=vmem, size = 0x1000, scoped, tag = 'output window, operand 2, single buffered']
    %11 = vsyncpa [#allocation3], 0
    %12 = vsyncpa [#allocation6], 0
    %13 = vsyncpa [#allocation4], 0
    %14 = vsyncpa [#allocation9], 0
    // Predicated region
    $region2: #{ratio_layer.1} parent=1 // pred_check
      _
    $region3: #{ratio_layer.1} parent=1 // pred_check_branch
      %16 = sbr.rel (0) target = $region5
    $region4: #{ratio_layer.1} parent=1 // pred_region
      %s18 = ssub.s32 128, 128
      %19 = vsyncadd [#allocation3], %s18
      %s21 = sshll.u32 [#allocation2], 4
      %s22 = int_to_ptr.vmem [resolvable:$true] %s21
      %24 = dma.hbm_to_vmem [thread:$0]  %s0, 128, %s22, [#allocation3]
    $region5: #{ratio_layer.1} parent=1 // pred_fallthru
      _
    // Predicated region
    $region6: #{ratio_layer.1} parent=1 // pred_check
      _
    $region7: #{ratio_layer.1} parent=1 // pred_check_branch
      %26 = sbr.rel (0) target = $region9
    $region8: #{ratio_layer.1} parent=1 // pred_region
      %s28 = ssub.s32 1024, 1024
      %29 = vsyncadd [#allocation6], %s28
      %s30 = sshll.u32 [#allocation5], 4
      %s31 = int_to_ptr.vmem [resolvable:$true] %s30
      %36 = dma.hbm_to_vmem [thread:$0]  %s1, 1024, %s31, [#allocation6], 256, 256, 16
    $region9: #{ratio_layer.1} parent=1 // pred_fallthru
      _
    // Predicated region
    $region10: #{ratio_layer.1} parent=1 // pred_check
      _
    $region11: #{ratio_layer.1} parent=1 // pred_check_branch
      %38 = sbr.rel (0) target = $region13
    $region12: #{ratio_layer.1} parent=1 // pred_region
      _
    $region13: #{ratio_layer.1} parent=1 // pred_fallthru
      _
    // Predicated region
    $region14: #{ratio_layer.1} parent=1 // pred_check
      _
    $region15: #{ratio_layer.1} parent=1 // pred_check_branch
      %40 = sbr.rel (0) target = $region17
    $region16: #{ratio_layer.1} parent=1 // pred_region
      %41 = dma.done [#allocation3], 128
    $region17: #{ratio_layer.1} parent=1 // pred_fallthru
      _
    // Predicated region
    $region18: #{ratio_layer.1} parent=1 // pred_check
      _
    $region19: #{ratio_layer.1} parent=1 // pred_check_branch
      %43 = sbr.rel (0) target = $region21
    $region20: #{ratio_layer.1} parent=1 // pred_region
      %44 = dma.done [#allocation6], 1024
    $region21: #{ratio_layer.1} parent=1 // pred_fallthru
      _
    %v45 = vld [vmem:[#allocation2] sm:$0xff]
    %v46 = vld [vmem:[#allocation5] sm:$0xff]
    %v47 = vld [vmem:[#allocation5 + $0x8] sm:$0xff]
    %v48 = vld [vmem:[#allocation5 + $0x10] sm:$0xff]
    %v49 = vld [vmem:[#allocation5 + $0x18] sm:$0xff]
    %v50 = vld [vmem:[#allocation5 + $0x20] sm:$0xff]
    %v51 = vld [vmem:[#allocation5 + $0x28] sm:$0xff]
    %v52 = vld [vmem:[#allocation5 + $0x30] sm:$0xff]
    %v53 = vld [vmem:[#allocation5 + $0x38] sm:$0xff]
    %v54 = vld [vmem:[%s2] sm:$0x3]
    %v56 = vlaneseq
    %v57 = vshrl.u32 %v56, 7
    %v58 = vsub.s32 0, %v57
    %v59 = vrot.slane %v54, %v58
    %v60 = vlaneseq
    %v61 = vshrl.u32 %v60, 7
    %v62 = vsub.s32 1, %v61
    %v63 = vrot.slane %v54, %v62
    %vm66 = vcmask 261120
    %v68 = vsel %vm66, %v45, 0
    %70 = vmatprep.subr.mxu0 0.0
    %71 = vmatpush1.msra.mxu0 0.0
    %72 = vmatprep.subr.mxu0 0.0
    %73 = vmatpush1.msra.mxu0 0.0
    %74 = vmatprep.subr.mxu0 0.0
    %75 = vmatpush1.msra.mxu0 0.0
    %76 = vmatprep.subr.mxu0 0.0
    %77 = vmatpush1.msra.mxu0 0.0
    %78 = vmatprep.subr.mxu0 0.0
    %79 = vmatpush1.msra.mxu0 0.0
    %80 = vmatprep.subr.mxu0 0.0
    %81 = vmatpush1.msra.mxu0 0.0
    %82 = vmatprep.subr.mxu0 0.0
    %83 = vmatpush1.msra.mxu0 0.0
    %84 = vmatprep.subr.mxu0 0.0
    %85 = vmatpush1.msra.mxu0 0.0
    %86 = vmatprep.subr.mxu0 0.0
    %87 = vmatpush1.msra.mxu0 0.0
    %88 = vmatprep.subr.mxu0 0.0
    %89 = vmatpush1.msra.mxu0 0.0
    %90 = vmatprep.subr.mxu0 0.0
    %91 = vmatpush1.msra.mxu0 0.0
    %92 = vmatprep.subr.mxu0 0.0
    %93 = vmatpush1.msra.mxu0 0.0
    %94 = vmatprep.subr.mxu0 %v53
    %95 = vmatpush1.msra.mxu0 %v52
    %96 = vmatprep.subr.mxu0 %v51
    %97 = vmatpush1.msra.mxu0 %v50
    %98 = vmatprep.subr.mxu0 %v49
    %99 = vmatpush1.msra.mxu0 %v48
    %100 = vmatprep.subr.mxu0 %v47
    %101 = vmatpush1.msra.mxu0 %v46
    %102 = vmatprep.subr.mxu0 0.0
    %103 = vmatpush2.msra.mxu0 0.0
    %104 = vmatprep.subr.mxu0 0.0
    %105 = vmatpush2.msra.mxu0 0.0
    %106 = vmatprep.subr.mxu0 0.0
    %107 = vmatpush2.msra.mxu0 0.0
    %108 = vmatprep.subr.mxu0 0.0
    %109 = vmatpush2.msra.mxu0 0.0
    %110 = vmatprep.subr.mxu0 0.0
    %111 = vmatpush2.msra.mxu0 0.0
    %112 = vmatprep.subr.mxu0 0.0
    %113 = vmatpush2.msra.mxu0 0.0
    %114 = vmatprep.subr.mxu0 0.0
    %115 = vmatpush2.msra.mxu0 0.0
    %116 = vmatprep.subr.mxu0 0.0
    %117 = vmatpush2.msra.mxu0 0.0
    %118 = vmatprep.subr.mxu0 0.0
    %119 = vmatpush2.msra.mxu0 0.0
    %120 = vmatprep.subr.mxu0 0.0
    %121 = vmatpush2.msra.mxu0 0.0
    %122 = vmatprep.subr.mxu0 0.0
    %123 = vmatpush2.msra.mxu0 0.0
    %124 = vmatprep.subr.mxu0 0.0
    %125 = vmatpush2.msra.mxu0 0.0
    %126 = vmatprep.subr.mxu0 0.0
    %127 = vmatpush2.msra.mxu0 0.0
    %128 = vmatprep.subr.mxu0 0.0
    %129 = vmatpush2.msra.mxu0 0.0
    %130 = vmatprep.subr.mxu0 0.0
    %131 = vmatpush2.msra.mxu0 0.0
    %132 = vmatprep.subr.mxu0 0.0
    %133 = vmatpush2.msra.mxu0 0.0
    %134 = vmatprep.mubr.f32.mxu0 0.0
    %135 = vmatmul.mubr.f32.gmra.mxu0 %v68
    %v136 = vpop.f32.mrf.mxu0
    %v137 = vadd.f32 %v59, %v136
    %v138 = vpop.f32.mrf.mxu0
    %v139 = vadd.f32 %v63, %v138
    %140 = vdwg.mxu0
    %v141 = vsub.f32 0.0, %v137
    %v142 = vmin.f32 %v141, 30.0
    %v143 = vmul.f32 %v142, 1.442695
    %v144 = vpow.pop %v143
    %v145 = vadd.f32 %v144, 1.0
    %v146 = vsub.f32 0.0, %v139
    %v147 = vmin.f32 %v146, 30.0
    %v148 = vmul.f32 %v147, 1.442695
    %v149 = vpow.pop %v148
    %v150 = vadd.f32 %v149, 1.0
    %v151 = vmul.f32 %v150, 1.1920929e-07
    %v152 = vadd.f32 %v151, 1.0
    %v153 = vmul.f32 %v145, %v152
    %v154 = vrcp.pop %v153
    %v155 = vmul.f32 %v153, %v154
    %v156 = vsub.f32 2.0, %v155
    %v157 = vmul.f32 %v154, %v156
    %v158 = vmul.f32 %v153, %v157
    %v159 = vsub.f32 2.0, %v158
    %v160 = vmul.f32 %v157, %v159
    %v161 = vmul.f32 %v150, %v160
    %vm162 = vcmask 130048
    %163 = vst.msk [vmem:[#allocation7] sm:$0xff] %vm162, %v161
    %164 = vst.msk [vmem:[#allocation8] sm:$0xff] %vm162, %v137
    %165 = vst.msk [vmem:[#allocation10] sm:$0xff] %vm162, %v139
    // Predicated region
    $region22: #{ratio_layer.1} parent=1 // pred_check
      _
    $region23: #{ratio_layer.1} parent=1 // pred_check_branch
      %167 = sbr.rel (0) target = $region25
    $region24: #{ratio_layer.1} parent=1 // pred_region
      %s169 = ssub.s32 128, 128
      %170 = vsyncadd [#allocation4], %s169
      %s172 = sshll.u32 [#allocation7], 4
      %s173 = int_to_ptr.vmem [resolvable:$true] %s172
      %175 = dma.vmem_to_hbm [thread:$0]  %s173, 128, %s3, [#allocation4]
    $region25: #{ratio_layer.1} parent=1 // pred_fallthru
      _
    // Predicated region
    $region26: #{ratio_layer.1} parent=1 // pred_check
      _
    $region27: #{ratio_layer.1} parent=1 // pred_check_branch
      %177 = sbr.rel (0) target = $region29
    $region28: #{ratio_layer.1} parent=1 // pred_region
      %s179 = ssub.s32 128, 128
      %180 = vsyncadd [#allocation9], %s179
      %s182 = sshll.u32 [#allocation8], 4
      %s183 = int_to_ptr.vmem [resolvable:$true] %s182
      %185 = dma.vmem_to_hbm [thread:$0]  %s183, 128, %s4, [#allocation9]
    $region29: #{ratio_layer.1} parent=1 // pred_fallthru
      _
    // Predicated region
    $region30: #{ratio_layer.1} parent=1 // pred_check
      _
    $region31: #{ratio_layer.1} parent=1 // pred_check_branch
      %187 = sbr.rel (0) target = $region33
    $region32: #{ratio_layer.1} parent=1 // pred_region
      %s189 = ssub.s32 128, 128
      %190 = vsyncadd [#allocation9], %s189
      %s192 = sshll.u32 [#allocation10], 4
      %s193 = int_to_ptr.vmem [resolvable:$true] %s192
      %195 = dma.vmem_to_hbm [thread:$0]  %s193, 128, %s5, [#allocation9]
    $region33: #{ratio_layer.1} parent=1 // pred_fallthru
      _
    // Predicated region
    $region34: #{ratio_layer.1} parent=1 // pred_check
      _
    $region35: #{ratio_layer.1} parent=1 // pred_check_branch
      %197 = sbr.rel (0) target = $region37
    $region36: #{ratio_layer.1} parent=1 // pred_region
      %198 = dma.done [#allocation4], 128
    $region37: #{ratio_layer.1} parent=1 // pred_fallthru
      _
    // Predicated region
    $region38: #{ratio_layer.1} parent=1 // pred_check
      _
    $region39: #{ratio_layer.1} parent=1 // pred_check_branch
      %200 = sbr.rel (0) target = $region41
    $region40: #{ratio_layer.1} parent=1 // pred_region
      %201 = dma.done [#allocation9], 128
    $region41: #{ratio_layer.1} parent=1 // pred_fallthru
      _
    // Predicated region
    $region42: #{ratio_layer.1} parent=1 // pred_check
      _
    $region43: #{ratio_layer.1} parent=1 // pred_check_branch
      %203 = sbr.rel (0) target = $region45
    $region44: #{ratio_layer.1} parent=1 // pred_region
      %204 = dma.done [#allocation9], 128
    $region45: #{ratio_layer.1} parent=1 // pred_fallthru
      _
    %205 = vsyncpa [#allocation3], 1
    %206 = vsyncpa [#allocation6], 1
    %207 = vsyncpa [#allocation4], 1
    %208 = vsyncpa [#allocation9], 1

</llo_original>
